<compile_context>
chip_gen: v7x
topology: tpu7x:2x2x1
jax: 0.10.0
libtpu: 0.0.40
codegen_flags: <defaults>
</compile_context>

<pallas_src>
import jax
import jax.numpy as jnp
from jax.experimental import pallas as pl
from jax.experimental.pallas import tpu as pltpu

LANE = 128            # lane width (last dim of the 2D slab)
MAX_TILE_ROWS = 2048  # (2048, 128) f32 = 1 MiB block; 4 MiB resident double-buffered


def _round_up(n, m):
    return ((n + m - 1) // m) * m


def dstar_poly_kernel(coef_ref, intercept_ref, x_ref, o_ref):
    """coef_ref: SMEM (4,), intercept_ref: SMEM (1,), x_ref/o_ref: VMEM (tile, 128)."""
    x = x_ref[...]
    c0 = coef_ref[0]
    c1 = coef_ref[1]
    c2 = coef_ref[2]
    c3 = coef_ref[3]
    b = intercept_ref[0]
    # Horner form of c0*x + c1*x^2 + c2*x^3 + c3*x^4 + b
    o_ref[...] = (((c3 * x + c2) * x + c1) * x + c0) * x + b


def dstar_poly(x, coef, intercept):
    """x: (N, 1), coef: (4, 1), intercept: scalar -> (N, 1) f32."""
    N, one = x.shape
    assert one == 1, "Dstar_poly expects feature dim 1"

    x = x.astype(jnp.float32)
    flat = x.reshape(N)

    # Pad (statically) to a multiple of 8*128 so the 2D slab has rows % 8 == 0
    # and every steady-state tile is a full unmasked (tile_rows, 128) block.
    n_pad = _round_up(N, 8 * LANE)
    if n_pad != N:
        flat = jnp.pad(flat, (0, n_pad - N))
    rows = n_pad // LANE

    tile_rows = min(MAX_TILE_ROWS, rows)        # rows and tile_rows are multiples of 8
    grid = (pl.cdiv(rows, tile_rows),)          # partial last block handled by Pallas

    coef_flat = coef.reshape(4).astype(jnp.float32)
    intercept_arr = jnp.reshape(intercept, (1,)).astype(jnp.float32)

    out2d = pl.pallas_call(
        dstar_poly_kernel,
        out_shape=jax.ShapeDtypeStruct((rows, LANE), jnp.float32),
        grid=grid,
        in_specs=[
            pl.BlockSpec(memory_space=pltpu.MemorySpace.SMEM),   # coef (4,)
            pl.BlockSpec(memory_space=pltpu.MemorySpace.SMEM),   # intercept (1,)
            pl.BlockSpec((tile_rows, LANE), lambda i: (i, 0)),   # x tile
        ],
        out_specs=pl.BlockSpec((tile_rows, LANE), lambda i: (i, 0)),
        compiler_params=pltpu.CompilerParams(
            dimension_semantics=("parallel",)),
    )(coef_flat, intercept_arr, x2d := flat.reshape(rows, LANE))

    out_flat = out2d.reshape(n_pad)
    if n_pad != N:
        out_flat = out_flat[:N]
    return out_flat.reshape(N, 1)


def _reference(x, coef, intercept):
    """Pure-JAX reference mirroring the PyTorch forward exactly."""
    x = x.astype(jnp.float32)
    Xin = jnp.concatenate([x, x**2, x**3, x**4], axis=1)         # (N, 4)
    return Xin @ coef.astype(jnp.float32) + intercept            # (N, 1)


if __name__ == "__main__":
    key = jax.random.PRNGKey(0)
    kx, kc, ki = jax.random.split(key, 3)

    # Deterministic parameter init (module defaults are zeros; use small random
    # values so the test is non-trivial).
    coef = jax.random.normal(kc, (4, 1), dtype=jnp.float32) * 0.1
    intercept = jax.random.normal(ki, (), dtype=jnp.float32)

    # Three shapes: aligned, small non-multiple of 128 (pad/slice path), and
    # one large enough to exercise grid > 1 with a partial last tile.
    for n in (1024, 5000, 300_000):
        x = jax.random.normal(kx, (n, 1), dtype=jnp.float32)
        res = dstar_poly(x, coef, intercept)
        res = jax.block_until_ready(res)
        ref = _reference(x, coef, intercept)
        assert res.shape == (n, 1)
        assert jnp.allclose(res, ref, atol=1e-5, rtol=1e-5), f"mismatch at N={n}"

    print("KERNEL_OK")
</pallas_src>

<mosaic_0001>
module attributes {stable_mosaic.version = 11 : i64} {
  func.func @dstar_poly_kernel(%arg0: i32, %arg1: memref<4xf32, #tpu.memory_space<smem>>, %arg2: memref<1xf32, #tpu.memory_space<smem>>, %arg3: memref<8x128xf32, #tpu.memory_space<vmem>>, %arg4: memref<8x128xf32, #tpu.memory_space<vmem>>) attributes {dimension_semantics = [#tpu.dimension_semantics<parallel>], iteration_bounds = array<i64: 1>, scalar_prefetch = 0 : i64, scratch_operands = 0 : i64, tpu.core_type = #tpu.core_type<tc>, window_params = [{transform_indices = @transform_0, window_bounds = array<i64: 4>}, {transform_indices = @transform_1, window_bounds = array<i64: 1>}, {transform_indices = @transform_2, window_bounds = array<i64: 8, 128>}, {transform_indices = @transform_3, window_bounds = array<i64: 8, 128>}]} {
    %c0 = arith.constant 0 : index
    %c0_0 = arith.constant 0 : index
    %0 = vector.load %arg3[%c0, %c0_0] : memref<8x128xf32, #tpu.memory_space<vmem>>, vector<8x128xf32>
    %c0_1 = arith.constant 0 : index
    %1 = memref.load %arg1[%c0_1] : memref<4xf32, #tpu.memory_space<smem>>
    %c1 = arith.constant 1 : index
    %2 = memref.load %arg1[%c1] : memref<4xf32, #tpu.memory_space<smem>>
    %c2 = arith.constant 2 : index
    %3 = memref.load %arg1[%c2] : memref<4xf32, #tpu.memory_space<smem>>
    %c3 = arith.constant 3 : index
    %4 = memref.load %arg1[%c3] : memref<4xf32, #tpu.memory_space<smem>>
    %c0_2 = arith.constant 0 : index
    %5 = memref.load %arg2[%c0_2] : memref<1xf32, #tpu.memory_space<smem>>
    %6 = vector.broadcast %4 : f32 to vector<8x128xf32>
    %7 = arith.mulf %6, %0 : vector<8x128xf32>
    %8 = vector.broadcast %3 : f32 to vector<8x128xf32>
    %9 = arith.addf %7, %8 : vector<8x128xf32>
    %10 = arith.mulf %9, %0 : vector<8x128xf32>
    %11 = vector.broadcast %2 : f32 to vector<8x128xf32>
    %12 = arith.addf %10, %11 : vector<8x128xf32>
    %13 = arith.mulf %12, %0 : vector<8x128xf32>
    %14 = vector.broadcast %1 : f32 to vector<8x128xf32>
    %15 = arith.addf %13, %14 : vector<8x128xf32>
    %16 = arith.mulf %15, %0 : vector<8x128xf32>
    %17 = vector.broadcast %5 : f32 to vector<8x128xf32>
    %18 = arith.addf %16, %17 : vector<8x128xf32>
    %c0_3 = arith.constant 0 : index
    %c0_4 = arith.constant 0 : index
    %19 = vector.load %arg4[%c0_3, %c0_4] : memref<8x128xf32, #tpu.memory_space<vmem>>, vector<8x128xf32>
    tpu.vector_store %arg4[%c0_3, %c0_4], %18 {strides = array<i32>} : memref<8x128xf32, #tpu.memory_space<vmem>>, vector<8x128xf32>,
    return
  }
  func.func @transform_0(%arg0: i32) -> i32 {
    %c0_i32 = arith.constant 0 : i32
    %c0_i32_0 = arith.constant 0 : i32
    return %c0_i32 : i32
  }
  func.func @transform_1(%arg0: i32) -> i32 {
    %c0_i32 = arith.constant 0 : i32
    %c0_i32_0 = arith.constant 0 : i32
    return %c0_i32 : i32
  }
  func.func @transform_2(%arg0: i32) -> (i32, i32) {
    %c0_i32 = arith.constant 0 : i32
    %c0_i32_0 = arith.constant 0 : i32
    return %arg0, %c0_i32 : i32, i32
  }
  func.func @transform_3(%arg0: i32) -> (i32, i32) {
    %c0_i32 = arith.constant 0 : i32
    %c0_i32_0 = arith.constant 0 : i32
    return %arg0, %c0_i32 : i32, i32
  }
}

</mosaic_0001>

<llo_original>
// kernel: tpu_custom_call.1
$region0: #{tpu_custom_call.1}
  #allocation0 [shape = 'u32[]', space=smem, size = 0x4, offset = 0x4, fixed_abs, tag = 'smem constant byte address 0x4 - core index']
  #allocation1 [shape = 'u32[144,128]{1,0:T(1,128)}', space=vmem, size = 0x12000, scoped, tag = 'internal scratch']
  #allocation2 [shape = 'f32[1]{0:T(128)S(6)}', space=smem, size = 0x200, scoped, tag = 'scoped memory for tpu_custom_call.1']
  %s0 = inlined_call_operand.vmem [shape: f32[4], index: 0, kind: input, shape index: {}]
  %s1 = inlined_call_operand.<no memory space> [shape: f32[1], index: 1, kind: input, shape index: {}]
  %s2 = inlined_call_operand.hbm [shape: f32[8,128], index: 2, kind: input, shape index: {}]
  %s3 = inlined_call_operand.hbm [shape: f32[8,128], index: 3, kind: output, shape index: {}]
  %s4 = sld [smem:[#allocation0]]
  $region30: #{tpu_custom_call.1} parent=0
    _
  %s6 = ssub.s32 1, %s4
  %s7 = scalar_select 0, %s6, %s4
  %8 = sst [smem:[#allocation2]] %s1
  $region1: #{tpu_custom_call.1} parent=0
    #allocation3 [shape = 'u8[512]{0}', space=smem, size = 0x200, scoped, tag = 'input window, operand 0, single buffered']
    #allocation4 [shape = 's32[1]{0}', space=sflag, size = 0x4, scoped, tag = 'scoped memory for tpu_custom_call.1']
    #allocation5 [shape = 's32[1]{0}', space=sflag, size = 0x4, scoped, tag = 'scoped memory for tpu_custom_call.1']
    #allocation6 [shape = 's32[1]{0}', space=sflag, size = 0x4, scoped, tag = 'scoped memory for tpu_custom_call.1']
    #allocation7 [shape = 'u8[4096]{0}', space=vmem, size = 0x1000, scoped, tag = 'input window, operand 2, single buffered']
    #allocation8 [shape = 'u8[4096]{0}', space=vmem, size = 0x1000, scoped, tag = 'output window, operand 0, single buffered']
    %9 = vsyncpa [#allocation6], 0
    %10 = vsyncpa [#allocation4], 0
    %11 = vsyncpa [#allocation5], 0
    // Predicated region
    $region2: #{tpu_custom_call.1} parent=1 // pred_check
      _
    $region3: #{tpu_custom_call.1} parent=1 // pred_check_branch
      %13 = sbr.rel (0) target = $region5
    $region4: #{tpu_custom_call.1} parent=1 // pred_region
      %s15 = ssub.s32 16, 16
      %16 = vsyncadd [#allocation6], %s15
      %s18 = sshll.u32 %s0, 4
      %s19 = int_to_ptr.vmem [resolvable:$true] %s18
      %21 = dma.vmem_to_smem %s19, 16, [#allocation3], [#allocation6]
    $region5: #{tpu_custom_call.1} parent=1 // pred_fallthru
      _
    // Predicated region
    $region6: #{tpu_custom_call.1} parent=1 // pred_check
      _
    $region7: #{tpu_custom_call.1} parent=1 // pred_check_branch
      %23 = sbr.rel (0) target = $region9
    $region8: #{tpu_custom_call.1} parent=1 // pred_region
      _
    $region9: #{tpu_custom_call.1} parent=1 // pred_fallthru
      _
    // Predicated region
    $region10: #{tpu_custom_call.1} parent=1 // pred_check
      _
    $region11: #{tpu_custom_call.1} parent=1 // pred_check_branch
      %25 = sbr.rel (0) target = $region13
    $region12: #{tpu_custom_call.1} parent=1 // pred_region
      %s27 = ssub.s32 128, 128
      %28 = vsyncadd [#allocation4], %s27
      %s30 = sshll.u32 [#allocation7], 4
      %s31 = int_to_ptr.vmem [resolvable:$true] %s30
      %33 = dma.hbm_to_vmem [thread:$0]  %s2, 128, %s31, [#allocation4]
    $region13: #{tpu_custom_call.1} parent=1 // pred_fallthru
      _
    // Predicated region
    $region14: #{tpu_custom_call.1} parent=1 // pred_check
      _
    $region15: #{tpu_custom_call.1} parent=1 // pred_check_branch
      %35 = sbr.rel (0) target = $region17
    $region16: #{tpu_custom_call.1} parent=1 // pred_region
      %36 = dma.done [#allocation6], 16
    $region17: #{tpu_custom_call.1} parent=1 // pred_fallthru
      _
    // Predicated region
    $region18: #{tpu_custom_call.1} parent=1 // pred_check
      _
    $region19: #{tpu_custom_call.1} parent=1 // pred_check_branch
      %38 = sbr.rel (0) target = $region21
    $region20: #{tpu_custom_call.1} parent=1 // pred_region
      %39 = dma.done [#allocation4], 128
    $region21: #{tpu_custom_call.1} parent=1 // pred_fallthru
      _
    %40 = sfence
    %v41 = vld [vmem:[#allocation7] sm:$0xff]
    %s42 = sld [smem:[#allocation3]]
    %s43 = sld [smem:[#allocation3 + $0x1]]
    %s44 = sld [smem:[#allocation3 + $0x2]]
    %s45 = sld [smem:[#allocation3 + $0x3]]
    %s46 = sld [smem:[#allocation2]]
    %v47 = vstv %s45
    %v48 = vmul.f32 %v47, %v41
    %v49 = vstv %s44
    %v50 = vadd.f32 %v48, %v49
    %v51 = vmul.f32 %v50, %v41
    %v52 = vstv %s43
    %v53 = vadd.f32 %v51, %v52
    %v54 = vmul.f32 %v53, %v41
    %v55 = vstv %s42
    %v56 = vadd.f32 %v54, %v55
    %v57 = vmul.f32 %v56, %v41
    %v58 = vstv %s46
    %v59 = vadd.f32 %v57, %v58
    %60 = vst [vmem:[#allocation8] sm:$0xff] %v59
    // Predicated region
    $region22: #{tpu_custom_call.1} parent=1 // pred_check
      _
    $region23: #{tpu_custom_call.1} parent=1 // pred_check_branch
      %62 = sbr.rel (0) target = $region25
    $region24: #{tpu_custom_call.1} parent=1 // pred_region
      %s64 = ssub.s32 128, 128
      %65 = vsyncadd [#allocation5], %s64
      %s67 = sshll.u32 [#allocation8], 4
      %s68 = int_to_ptr.vmem [resolvable:$true] %s67
      %70 = dma.vmem_to_hbm [thread:$0]  %s68, 128, %s3, [#allocation5]
    $region25: #{tpu_custom_call.1} parent=1 // pred_fallthru
      _
    // Predicated region
    $region26: #{tpu_custom_call.1} parent=1 // pred_check
      _
    $region27: #{tpu_custom_call.1} parent=1 // pred_check_branch
      %72 = sbr.rel (0) target = $region29
    $region28: #{tpu_custom_call.1} parent=1 // pred_region
      %73 = dma.done [#allocation5], 128
    $region29: #{tpu_custom_call.1} parent=1 // pred_fallthru
      _
    %74 = vsyncpa [#allocation4], 1
    %75 = vsyncpa [#allocation5], 1
    %76 = vsyncpa [#allocation6], 1

</llo_original>
